<compile_context>
chip_gen: v7x
topology: tpu7x:2x2x1
jax: 0.10.0
libtpu: 0.0.40
codegen_flags: <defaults>
</compile_context>

<pallas_src>
import jax
import jax.numpy as jnp
from jax import lax
from jax.experimental import pallas as pl
from jax.experimental.pallas import tpu as pltpu


def platenet_kernel(idx_t_ref, p_ref, out_ref):
    """One grid step handles a lane-dense tile of TB batch rows.

    idx_t_ref : (S, TB) int32  -- token ids; sequence on sublanes, batch on lanes
    p_ref     : (V, 1)  float32 -- precomputed p[v] = <emb[v,:], w>
    out_ref   : (1, TB) float32 -- lane-dense output row for this batch tile
    """
    V, _ = p_ref.shape
    S, TB = idx_t_ref.shape

    # counts[v, b] = #{s : idx[b, s] == v}, built with dense compares.
    # Tokens outside [0, V) contribute nothing.
    vocab = lax.broadcasted_iota(jnp.int32, (V, TB), 0)                   # (V, TB)
    idx_t = idx_t_ref[...]                                                # (S, TB)
    counts = jnp.zeros((V, TB), jnp.float32)
    # S is static and small (plate length) -> fully unrolled VPU adds.
    # TODO(synk): switch to lax.fori_loop(..., unroll=True) if S ever grows >~32.
    for s in range(S):
        counts = counts + (vocab == idx_t[s:s + 1, :]).astype(jnp.float32)

    # out[b] = sum_v counts[v, b] * p[v]   (tiny V: keep on VPU/XLU, skip MXU)
    out_ref[...] = jnp.sum(p_ref[...] * counts, axis=0, keepdims=True).astype(out_ref.dtype)


def platenet_forward(indices, input_lengths, emb_table, lin_w, *, batch_tile=None):
    """indices: (B, S) int, emb_table: (V, D) f32, lin_w: (1, D) f32 -> (B, 1) f32."""
    del input_lengths  # the reference forward ignores it

    B, S = indices.shape
    V, D = emb_table.shape

    # Hoist the Linear fold out of the kernel (runs once, not once per grid step):
    # p[v] = <emb[v, :], w>   -> (V, 1) f32
    p = jnp.asarray(emb_table, jnp.float32) @ jnp.asarray(lin_w, jnp.float32).reshape(D, 1)

    # Tile selection: 128-aligned lane tiles.  Small batches collapse to a
    # single step; large batches use TB=512 (amortizes the ~600-cycle per-step
    # overhead, keeps counts+iota live state small).  On v7x the resulting
    # n_tiles >= 2 for B > 512 keeps both TensorCores busy via "parallel".
    if batch_tile is None:
        batch_tile = min(512, ((B + 127) // 128) * 128)
    TB = batch_tile
    n_tiles = pl.cdiv(B, TB)
    B_pad = n_tiles * TB

    # Batch onto the lane axis: (B, S) -> (S, B_pad); padded ids are 0 (zero row).
    idx_t = jnp.transpose(indices.astype(jnp.int32))                      # (S, B)
    idx_t = jnp.pad(idx_t, ((0, 0), (0, B_pad - B)))                      # (S, B_pad)

    out = pl.pallas_call(
        platenet_kernel,
        out_shape=jax.ShapeDtypeStruct((n_tiles, TB), jnp.float32),
        grid=(n_tiles,),
        in_specs=[
            pl.BlockSpec((S, TB), lambda i: (0, i)),   # this tile's token ids
            pl.BlockSpec((V, 1), lambda i: (0, 0)),    # folded table, constant index
        ],
        out_specs=pl.BlockSpec((1, TB), lambda i: (i, 0)),  # disjoint lane-dense rows
        compiler_params=pltpu.CompilerParams(
            dimension_semantics=("parallel",),          # shards tiles across v7x's 2 TCs
            vmem_limit_bytes=32 * 1024 * 1024,          # explicit; raises v5e's 16MiB default
        ),
    )(idx_t, p)

    # Un-pad and restore the module's (B, 1) output shape.
    return out.reshape(B_pad)[:B].reshape(B, 1)


if __name__ == "__main__":
    key = jax.random.PRNGKey(0)
    k_emb, k_lin, k_idx = jax.random.split(key, 3)

    # Small shapes consistent with the module
    num_embeddings, embedding_dim = 16, 32
    B, S = 2, 8

    # Deterministic synthetic parameters (Embedding(padding_idx=0) + Linear(D, 1, bias=False))
    emb_table = jax.random.normal(k_emb, (num_embeddings, embedding_dim), jnp.float32)
    emb_table = emb_table.at[0].set(0.0)          # padding_idx=0 -> zero row, as in torch
    lin_w = 0.1 * jax.random.normal(k_lin, (1, embedding_dim), jnp.float32)

    # Inputs: padded token-id batch + lengths (lengths unused in forward, kept for parity)
    indices = jax.random.randint(k_idx, (B, S), 0, num_embeddings, dtype=jnp.int32)
    indices = indices.at[1, 5:].set(0)            # simulate padding in second row
    input_lengths = jnp.array([S, 5], jnp.int32)

    out = platenet_forward(indices, input_lengths, emb_table, lin_w)
    out = jax.block_until_ready(out)

    # Pure-JAX reference of the PyTorch forward
    ref = jnp.take(emb_table, indices, axis=0).sum(axis=1) @ lin_w.T
    assert out.shape == (B, 1)
    assert jnp.allclose(out, ref, atol=1e-5, rtol=1e-5)

    print("KERNEL_OK")
</pallas_src>

<mosaic_0001>
module attributes {stable_mosaic.version = 11 : i64} {
  func.func @platenet_kernel(%arg0: i32, %arg1: memref<8x128xi32, #tpu.memory_space<vmem>>, %arg2: memref<16x1xf32, #tpu.memory_space<vmem>>, %arg3: memref<1x128xf32, #tpu.memory_space<vmem>>) attributes {dimension_semantics = [#tpu.dimension_semantics<parallel>], iteration_bounds = array<i64: 1>, scalar_prefetch = 0 : i64, scratch_operands = 0 : i64, tpu.core_type = #tpu.core_type<tc>, window_params = [{transform_indices = @transform_0, window_bounds = array<i64: 8, 128>}, {pipeline_mode = #tpu.pipeline_mode<synchronous>, transform_indices = @transform_1, window_bounds = array<i64: 16, 1>}, {transform_indices = @transform_2, window_bounds = array<i64: 1, 128>}]} {
    %0 = tpu.iota {dimensions = array<i32: 0>} : vector<16x128xi32>
    %c0 = arith.constant 0 : index
    %c0_0 = arith.constant 0 : index
    %1 = vector.load %arg1[%c0, %c0_0] : memref<8x128xi32, #tpu.memory_space<vmem>>, vector<8x128xi32>
    %cst = arith.constant 0.000000e+00 : f32
    %2 = vector.broadcast %cst : f32 to vector<16x128xf32>
    %3 = vector.extract_strided_slice %1 {offsets = [0, 0], sizes = [1, 128], strides = [1, 1]} : vector<8x128xi32> to vector<1x128xi32>
    %4 = vector.broadcast %3 : vector<1x128xi32> to vector<16x128xi32>
    %5 = arith.cmpi eq, %0, %4 : vector<16x128xi32>
    %6 = arith.extui %5 : vector<16x128xi1> to vector<16x128xi32>
    %7 = arith.sitofp %6 : vector<16x128xi32> to vector<16x128xf32>
    %8 = arith.addf %2, %7 : vector<16x128xf32>
    %9 = vector.extract_strided_slice %1 {offsets = [1, 0], sizes = [1, 128], strides = [1, 1]} : vector<8x128xi32> to vector<1x128xi32>
    %10 = vector.broadcast %9 : vector<1x128xi32> to vector<16x128xi32>
    %11 = arith.cmpi eq, %0, %10 : vector<16x128xi32>
    %12 = arith.extui %11 : vector<16x128xi1> to vector<16x128xi32>
    %13 = arith.sitofp %12 : vector<16x128xi32> to vector<16x128xf32>
    %14 = arith.addf %8, %13 : vector<16x128xf32>
    %15 = vector.extract_strided_slice %1 {offsets = [2, 0], sizes = [1, 128], strides = [1, 1]} : vector<8x128xi32> to vector<1x128xi32>
    %16 = vector.broadcast %15 : vector<1x128xi32> to vector<16x128xi32>
    %17 = arith.cmpi eq, %0, %16 : vector<16x128xi32>
    %18 = arith.extui %17 : vector<16x128xi1> to vector<16x128xi32>
    %19 = arith.sitofp %18 : vector<16x128xi32> to vector<16x128xf32>
    %20 = arith.addf %14, %19 : vector<16x128xf32>
    %21 = vector.extract_strided_slice %1 {offsets = [3, 0], sizes = [1, 128], strides = [1, 1]} : vector<8x128xi32> to vector<1x128xi32>
    %22 = vector.broadcast %21 : vector<1x128xi32> to vector<16x128xi32>
    %23 = arith.cmpi eq, %0, %22 : vector<16x128xi32>
    %24 = arith.extui %23 : vector<16x128xi1> to vector<16x128xi32>
    %25 = arith.sitofp %24 : vector<16x128xi32> to vector<16x128xf32>
    %26 = arith.addf %20, %25 : vector<16x128xf32>
    %27 = vector.extract_strided_slice %1 {offsets = [4, 0], sizes = [1, 128], strides = [1, 1]} : vector<8x128xi32> to vector<1x128xi32>
    %28 = vector.broadcast %27 : vector<1x128xi32> to vector<16x128xi32>
    %29 = arith.cmpi eq, %0, %28 : vector<16x128xi32>
    %30 = arith.extui %29 : vector<16x128xi1> to vector<16x128xi32>
    %31 = arith.sitofp %30 : vector<16x128xi32> to vector<16x128xf32>
    %32 = arith.addf %26, %31 : vector<16x128xf32>
    %33 = vector.extract_strided_slice %1 {offsets = [5, 0], sizes = [1, 128], strides = [1, 1]} : vector<8x128xi32> to vector<1x128xi32>
    %34 = vector.broadcast %33 : vector<1x128xi32> to vector<16x128xi32>
    %35 = arith.cmpi eq, %0, %34 : vector<16x128xi32>
    %36 = arith.extui %35 : vector<16x128xi1> to vector<16x128xi32>
    %37 = arith.sitofp %36 : vector<16x128xi32> to vector<16x128xf32>
    %38 = arith.addf %32, %37 : vector<16x128xf32>
    %39 = vector.extract_strided_slice %1 {offsets = [6, 0], sizes = [1, 128], strides = [1, 1]} : vector<8x128xi32> to vector<1x128xi32>
    %40 = vector.broadcast %39 : vector<1x128xi32> to vector<16x128xi32>
    %41 = arith.cmpi eq, %0, %40 : vector<16x128xi32>
    %42 = arith.extui %41 : vector<16x128xi1> to vector<16x128xi32>
    %43 = arith.sitofp %42 : vector<16x128xi32> to vector<16x128xf32>
    %44 = arith.addf %38, %43 : vector<16x128xf32>
    %45 = vector.extract_strided_slice %1 {offsets = [7, 0], sizes = [1, 128], strides = [1, 1]} : vector<8x128xi32> to vector<1x128xi32>
    %46 = vector.broadcast %45 : vector<1x128xi32> to vector<16x128xi32>
    %47 = arith.cmpi eq, %0, %46 : vector<16x128xi32>
    %48 = arith.extui %47 : vector<16x128xi1> to vector<16x128xi32>
    %49 = arith.sitofp %48 : vector<16x128xi32> to vector<16x128xf32>
    %50 = arith.addf %44, %49 : vector<16x128xf32>
    %c0_1 = arith.constant 0 : index
    %c0_2 = arith.constant 0 : index
    %51 = vector.load %arg2[%c0_1, %c0_2] : memref<16x1xf32, #tpu.memory_space<vmem>>, vector<16x1xf32>
    %52 = vector.broadcast %51 : vector<16x1xf32> to vector<16x128xf32>
    %53 = arith.mulf %52, %50 : vector<16x128xf32>
    %cst_3 = arith.constant dense<0.000000e+00> : vector<128xf32>
    %54 = vector.multi_reduction <add>, %53, %cst_3 [0] : vector<16x128xf32> to vector<128xf32>
    %55 = vector.shape_cast %54 : vector<128xf32> to vector<1x128xf32>
    %c0_4 = arith.constant 0 : index
    %c0_5 = arith.constant 0 : index
    %56 = vector.load %arg3[%c0_4, %c0_5] : memref<1x128xf32, #tpu.memory_space<vmem>>, vector<1x128xf32>
    tpu.vector_store %arg3[%c0_4, %c0_5], %55 {strides = array<i32>} : memref<1x128xf32, #tpu.memory_space<vmem>>, vector<1x128xf32>,
    return
  }
  func.func @transform_0(%arg0: i32) -> (i32, i32) {
    %c0_i32 = arith.constant 0 : i32
    %c0_i32_0 = arith.constant 0 : i32
    return %c0_i32, %arg0 : i32, i32
  }
  func.func @transform_1(%arg0: i32) -> (i32, i32) {
    %c0_i32 = arith.constant 0 : i32
    %c0_i32_0 = arith.constant 0 : i32
    %c0_i32_1 = arith.constant 0 : i32
    return %c0_i32, %c0_i32_0 : i32, i32
  }
  func.func @transform_2(%arg0: i32) -> (i32, i32) {
    %c0_i32 = arith.constant 0 : i32
    %c0_i32_0 = arith.constant 0 : i32
    return %arg0, %c0_i32 : i32, i32
  }
}

</mosaic_0001>

<llo_original>
// kernel: tpu_custom_call.1
$region0: #{tpu_custom_call.1}
  #allocation0 [shape = 'u32[]', space=smem, size = 0x4, offset = 0x4, fixed_abs, tag = 'smem constant byte address 0x4 - core index']
  #allocation1 [shape = 'u32[144,128]{1,0:T(1,128)}', space=vmem, size = 0x12000, scoped, tag = 'internal scratch']
  %s0 = inlined_call_operand.vmem [shape: s32[8,128], index: 0, kind: input, shape index: {}]
  %s1 = inlined_call_operand.vmem [shape: f32[16,1], index: 1, kind: input, shape index: {}]
  %s2 = inlined_call_operand.hbm [shape: f32[1,128], index: 2, kind: output, shape index: {}]
  %s3 = sld [smem:[#allocation0]]
  $region18: #{tpu_custom_call.1} parent=0
    _
  %s5 = ssub.s32 1, %s3
  %s6 = scalar_select 0, %s5, %s3
  $region1: #{tpu_custom_call.1} parent=0
    #allocation2 [shape = 'u8[512]{0}', space=vmem, size = 0x400, scoped, tag = 'output window, operand 0, single buffered']
    #allocation3 [shape = 's32[1]{0}', space=sflag, size = 0x4, scoped, tag = 'scoped memory for tpu_custom_call.1']
    %7 = vsyncpa [#allocation3], 0
    // Predicated region
    $region2: #{tpu_custom_call.1} parent=1 // pred_check
      _
    $region3: #{tpu_custom_call.1} parent=1 // pred_check_branch
      %9 = sbr.rel (0) target = $region5
    $region4: #{tpu_custom_call.1} parent=1 // pred_region
      _
    $region5: #{tpu_custom_call.1} parent=1 // pred_fallthru
      _
    // Predicated region
    $region6: #{tpu_custom_call.1} parent=1 // pred_check
      _
    $region7: #{tpu_custom_call.1} parent=1 // pred_check_branch
      %11 = sbr.rel (0) target = $region9
    $region8: #{tpu_custom_call.1} parent=1 // pred_region
      _
    $region9: #{tpu_custom_call.1} parent=1 // pred_fallthru
      _
    %v12 = vlaneseq
    %v13 = vshrl.u32 %v12, 7
    %v14 = vadd.s32 %v13, 8
    %v15 = vld [vmem:[%s0] sm:$0xff]
    %v16 = vlaneseq
    %v17 = vshrl.u32 %v16, 7
    %v18 = vsub.s32 0, %v17
    %v19 = vrot.slane %v15, %v18
    %vm20 = vcmp.eq.s32.totalorder %v13, %v19
    %vm21 = vcmp.eq.s32.totalorder %v14, %v19
    %v22 = vsel %vm20, 1, 0
    %v23 = vsel %vm21, 1, 0
    %v24 = vcvt.s32.f32 %v22
    %v25 = vcvt.s32.f32 %v23
    %v26 = vadd.f32 %v24, 0.0
    %v27 = vadd.f32 %v25, 0.0
    %v28 = vlaneseq
    %v29 = vshrl.u32 %v28, 7
    %v30 = vsub.s32 1, %v29
    %v31 = vrot.slane %v15, %v30
    %vm32 = vcmp.eq.s32.totalorder %v13, %v31
    %vm33 = vcmp.eq.s32.totalorder %v14, %v31
    %v34 = vsel %vm32, 1, 0
    %v35 = vsel %vm33, 1, 0
    %v36 = vcvt.s32.f32 %v34
    %v37 = vcvt.s32.f32 %v35
    %v38 = vadd.f32 %v26, %v36
    %v39 = vadd.f32 %v27, %v37
    %v40 = vlaneseq
    %v41 = vshrl.u32 %v40, 7
    %v42 = vsub.s32 2, %v41
    %v43 = vrot.slane %v15, %v42
    %vm44 = vcmp.eq.s32.totalorder %v13, %v43
    %vm45 = vcmp.eq.s32.totalorder %v14, %v43
    %v46 = vsel %vm44, 1, 0
    %v47 = vsel %vm45, 1, 0
    %v48 = vcvt.s32.f32 %v46
    %v49 = vcvt.s32.f32 %v47
    %v50 = vadd.f32 %v38, %v48
    %v51 = vadd.f32 %v39, %v49
    %v52 = vlaneseq
    %v53 = vshrl.u32 %v52, 7
    %v54 = vsub.s32 3, %v53
    %v55 = vrot.slane %v15, %v54
    %vm56 = vcmp.eq.s32.totalorder %v13, %v55
    %vm57 = vcmp.eq.s32.totalorder %v14, %v55
    %v58 = vsel %vm56, 1, 0
    %v59 = vsel %vm57, 1, 0
    %v60 = vcvt.s32.f32 %v58
    %v61 = vcvt.s32.f32 %v59
    %v62 = vadd.f32 %v50, %v60
    %v63 = vadd.f32 %v51, %v61
    %v64 = vlaneseq
    %v65 = vshrl.u32 %v64, 7
    %v66 = vsub.s32 4, %v65
    %v67 = vrot.slane %v15, %v66
    %vm68 = vcmp.eq.s32.totalorder %v13, %v67
    %vm69 = vcmp.eq.s32.totalorder %v14, %v67
    %v70 = vsel %vm68, 1, 0
    %v71 = vsel %vm69, 1, 0
    %v72 = vcvt.s32.f32 %v70
    %v73 = vcvt.s32.f32 %v71
    %v74 = vadd.f32 %v62, %v72
    %v75 = vadd.f32 %v63, %v73
    %v76 = vlaneseq
    %v77 = vshrl.u32 %v76, 7
    %v78 = vsub.s32 5, %v77
    %v79 = vrot.slane %v15, %v78
    %vm80 = vcmp.eq.s32.totalorder %v13, %v79
    %vm81 = vcmp.eq.s32.totalorder %v14, %v79
    %v82 = vsel %vm80, 1, 0
    %v83 = vsel %vm81, 1, 0
    %v84 = vcvt.s32.f32 %v82
    %v85 = vcvt.s32.f32 %v83
    %v86 = vadd.f32 %v74, %v84
    %v87 = vadd.f32 %v75, %v85
    %v88 = vlaneseq
    %v89 = vshrl.u32 %v88, 7
    %v90 = vsub.s32 6, %v89
    %v91 = vrot.slane %v15, %v90
    %vm92 = vcmp.eq.s32.totalorder %v13, %v91
    %vm93 = vcmp.eq.s32.totalorder %v14, %v91
    %v94 = vsel %vm92, 1, 0
    %v95 = vsel %vm93, 1, 0
    %v96 = vcvt.s32.f32 %v94
    %v97 = vcvt.s32.f32 %v95
    %v98 = vadd.f32 %v86, %v96
    %v99 = vadd.f32 %v87, %v97
    %v100 = vlaneseq
    %v101 = vshrl.u32 %v100, 7
    %v102 = vsub.s32 7, %v101
    %v103 = vrot.slane %v15, %v102
    %vm104 = vcmp.eq.s32.totalorder %v13, %v103
    %vm105 = vcmp.eq.s32.totalorder %v14, %v103
    %v106 = vsel %vm104, 1, 0
    %v107 = vsel %vm105, 1, 0
    %v108 = vcvt.s32.f32 %v106
    %v109 = vcvt.s32.f32 %v107
    %v110 = vadd.f32 %v98, %v108
    %v111 = vadd.f32 %v99, %v109
    %v112 = vld [vmem:[%s1] sm:$0xff]
    %v113 = vld [vmem:[%s1 + $0x8] sm:$0xff]
    %115 = vset.pattern.permute.xlu0 0
    %116 = vperm.xlu0 %115, %v112
    %v117 = vpop.permute.xlu0 %116
    %120 = vset.pattern.permute.xlu0 0
    %121 = vperm.xlu0 %120, %v113
    %v122 = vpop.permute.xlu0 %121
    %v124 = vmul.f32 %v117, %v110
    %v125 = vmul.f32 %v122, %v111
    %v126 = vadd.f32 %v124, %v125
    %v127 = vrot.slane %v126, 4
    %v128 = vadd.f32 %v126, %v127
    %v129 = vrot.slane %v128, 2
    %v130 = vadd.f32 %v128, %v129
    %v131 = vrot.slane %v130, 1
    %v132 = vadd.f32 %v130, %v131
    %133 = vst [vmem:[#allocation2] sm:$0x1] %v132
    // Predicated region
    $region10: #{tpu_custom_call.1} parent=1 // pred_check
      _
    $region11: #{tpu_custom_call.1} parent=1 // pred_check_branch
      %135 = sbr.rel (0) target = $region13
    $region12: #{tpu_custom_call.1} parent=1 // pred_region
      %s137 = ssub.s32 16, 16
      %138 = vsyncadd [#allocation3], %s137
      %s140 = sshll.u32 [#allocation2], 4
      %s141 = int_to_ptr.vmem [resolvable:$true] %s140
      %143 = dma.vmem_to_hbm [thread:$0]  %s141, 16, %s2, [#allocation3]
    $region13: #{tpu_custom_call.1} parent=1 // pred_fallthru
      _
    // Predicated region
    $region14: #{tpu_custom_call.1} parent=1 // pred_check
      _
    $region15: #{tpu_custom_call.1} parent=1 // pred_check_branch
      %145 = sbr.rel (0) target = $region17
    $region16: #{tpu_custom_call.1} parent=1 // pred_region
      %146 = dma.done [#allocation3], 16
    $region17: #{tpu_custom_call.1} parent=1 // pred_fallthru
      _
    %147 = vsyncpa [#allocation3], 1

</llo_original>
